<compile_context>
chip_gen: v7x
topology: tpu7x:2x2x1
jax: 0.10.0
libtpu: 0.0.40
codegen_flags: <defaults>
</compile_context>

<pallas_src>
import functools

import jax
import jax.numpy as jnp
from jax.experimental import pallas as pl
from jax.experimental.pallas import tpu as pltpu

LN_EPS = 1e-5  # PyTorch nn.LayerNorm default


def _round_up(x, m):
    return ((x + m - 1) // m) * m


# ---------------------------------------------------------------------------
# Fused kernel
# ---------------------------------------------------------------------------
def _seg_ln_relu(y, dout, g, beta):
    """Independent LayerNorm over lanes [0, dout) and [dout, 2*dout) of y, then ReLU.

    y may be wider than 2*dout (zero-padded lanes); those lanes stay finite and are
    mapped to 0 (gamma/beta are zero-padded there).
    """
    lane = jax.lax.broadcasted_iota(jnp.int32, y.shape, dimension=1)
    left = lane < dout
    right = jnp.logical_and(lane >= dout, lane < 2 * dout)
    zeros = jnp.zeros_like(y)
    inv_d = 1.0 / float(dout)

    sum_l = jnp.sum(jnp.where(left, y, zeros), axis=-1, keepdims=True)
    sum_r = jnp.sum(jnp.where(right, y, zeros), axis=-1, keepdims=True)
    mean = jnp.where(left, sum_l, sum_r) * inv_d
    cent = y - mean
    sq = cent * cent
    var = jnp.where(
        left,
        jnp.sum(jnp.where(left, sq, zeros), axis=-1, keepdims=True),
        jnp.sum(jnp.where(right, sq, zeros), axis=-1, keepdims=True),
    ) * inv_d
    y_norm = cent * jax.lax.rsqrt(var + LN_EPS)
    return jnp.maximum(y_norm * g + beta, 0.0)


def _make_fused_kernel(n_layers, input_batch_num, douts, out_width):
    """Fused merged-stack kernel.

    Ref order (inputs): inp, input_batch,
      layer 0 : w_top (input_dim, W0), w_bot (input_batch_num, W0), bgb0 (3, W0)
      layer i : w_i (2*d_{i-1}, W_i) block-diagonal, bgb_i (3, W_i)
      head    : (2, W_last)  row0 = [0 | lib_head_w | 0], row1[0,0] = lib_head_b
    Output: one lane-dense slab (tb, out_width): lanes [0, h_last) = rep,
            lane 2*h_last = lib scalar.
    """
    h_last = douts[-1]

    def kernel(inp_ref, batch_ref, *refs):
        out_ref = refs[-1]
        it = iter(refs[:-1])

        x = inp_ref[...]
        xb = batch_ref[...]

        # ---- layer 0: concat folded into split matmul; K=4 batch part on the VPU ----
        w_top = next(it)[...]
        w_bot = next(it)[...]
        bgb = next(it)[...]
        y = jnp.dot(x, w_top, preferred_element_type=jnp.float32)
        for k in range(input_batch_num):                       # static, tiny loop
            y = y + xb[:, k:k + 1] * w_bot[k:k + 1, :]
        y = y + bgb[0:1, :]
        h = _seg_ln_relu(y, douts[0], bgb[1:2, :], bgb[2:3, :])

        # ---- layers 1..: single block-diagonal merged matmul per layer ----
        for li in range(1, n_layers):
            w = next(it)[...]
            bgb = next(it)[...]
            y = jnp.dot(h, w, preferred_element_type=jnp.float32) + bgb[0:1, :]
            h = _seg_ln_relu(y, douts[li], bgb[1:2, :], bgb[2:3, :])

        # ---- lib head: VPU multiply + lane reduce (no N=1 matmul) ----
        head = next(it)[...]
        lib = jnp.sum(h * head[0:1, :], axis=-1, keepdims=True) + head[1:2, 0:1]

        # ---- lane-dense combined store: lib scalar dropped into lane 2*h_last ----
        lane = jax.lax.broadcasted_iota(jnp.int32, h.shape, dimension=1)
        out_ref[...] = jnp.where(lane == 2 * h_last, lib, h)

    return kernel


# ---------------------------------------------------------------------------
# Wrapper: single pallas_call, adaptive batch tiling, packed resident weights
# ---------------------------------------------------------------------------
def input_module_forward(params, inp, input_batch, *, tile_b=None):
    # TODO(synk): input_batch=None, add_linear_layer=True, dropout/batchnorm paths of
    # the PyTorch module (all disabled under its defaults) are not implemented here.
    B, input_dim = inp.shape
    input_batch_num = input_batch.shape[1]
    rep_layers = params["rep"]
    lib_layers = params["lib_fcnn"]
    n_layers = len(rep_layers)
    douts = tuple(int(w.shape[1]) for (w, _, _, _) in rep_layers)
    h_last = douts[-1]
    out_width = _round_up(2 * h_last + 1, 128)        # lane-dense output slab width

    # merged per-layer widths; only the LAST layer is padded up to out_width
    widths = [2 * d for d in douts]
    widths[-1] = out_width

    # ---- batch tile: large + adaptive, >= 2 steps once B > 64 (v7x 2-TC sharding) ----
    if tile_b is not None:
        tb = _round_up(max(1, min(tile_b, B)), 8)
    else:
        n_steps = 1 if B <= 64 else max(2, pl.cdiv(B, 1024))
        tb = _round_up(pl.cdiv(B, n_steps), 8)
    padded_B = _round_up(B, tb)
    if padded_B != B:
        pad_rows = padded_B - B
        inp_p = jnp.pad(inp, ((0, pad_rows), (0, 0)))
        batch_p = jnp.pad(input_batch, ((0, pad_rows), (0, 0)))
    else:
        inp_p, batch_p = inp, input_batch
    grid = (padded_B // tb,)

    # ---- pack parameters: merged (rep|lib) weights + (bias;gamma;beta) slabs + head ----
    flat_params = []
    in_specs = [
        pl.BlockSpec((tb, input_dim), lambda i: (i, 0)),
        pl.BlockSpec((tb, input_batch_num), lambda i: (i, 0)),
    ]

    def add_param(arr):
        flat_params.append(arr)
        # constant index map -> weight stays VMEM-resident across all grid steps
        in_specs.append(pl.BlockSpec(arr.shape, lambda i: (0, 0)))

    def merge_cols(a_rep, a_lib, width):
        m = jnp.concatenate([a_rep, a_lib], axis=1)
        pad = width - m.shape[1]
        return jnp.pad(m, ((0, 0), (0, pad))) if pad else m

    def pack_bgb(b_r, b_l, g_r, g_l, be_r, be_l, width):
        return jnp.concatenate(
            [merge_cols(b_r, b_l, width),
             merge_cols(g_r, g_l, width),
             merge_cols(be_r, be_l, width)], axis=0)              # (3, width)

    # layer 0: columns are [rep | lib | pad]; rows split into input / batch-covariate
    (w_r, b_r, g_r, be_r), (w_l, b_l, g_l, be_l) = rep_layers[0], lib_layers[0]
    w0 = merge_cols(w_r, w_l, widths[0])                          # (d0, W0)
    add_param(w0[:input_dim])                                     # input rows
    add_param(w0[input_dim:])                                     # batch-covariate rows
    add_param(pack_bgb(b_r, b_l, g_r, g_l, be_r, be_l, widths[0]))

    # layers 1..: block-diagonal merged weights (zero off-diagonal is free MXU slack)
    for li in range(1, n_layers):
        (w_r, b_r, g_r, be_r), (w_l, b_l, g_l, be_l) = rep_layers[li], lib_layers[li]
        din, dout = w_r.shape
        z = jnp.zeros((din, dout), jnp.float32)
        w_bd = jnp.concatenate(
            [jnp.concatenate([w_r, z], axis=1),
             jnp.concatenate([z, w_l], axis=1)], axis=0)          # (2*din, 2*dout)
        pad_cols = widths[li] - 2 * dout
        if pad_cols:
            w_bd = jnp.pad(w_bd, ((0, 0), (0, pad_cols)))
        add_param(w_bd)
        add_param(pack_bgb(b_r, b_l, g_r, g_l, be_r, be_l, widths[li]))

    # lib head packed into one (2, W_last) slab
    head_w, head_b = params["lib_head"]                           # (h_last, 1), (1, 1)
    head_row = jnp.pad(
        jnp.concatenate([jnp.zeros((1, h_last), jnp.float32), head_w.T], axis=1),
        ((0, 0), (0, out_width - 2 * h_last)))                    # (1, W_last)
    head_bias_row = jnp.pad(head_b, ((0, 0), (0, out_width - 1)))  # bias at [0, 0]
    add_param(jnp.concatenate([head_row, head_bias_row], axis=0))  # (2, W_last)

    out = pl.pallas_call(
        _make_fused_kernel(n_layers, input_batch_num, douts, out_width),
        out_shape=jax.ShapeDtypeStruct((padded_B, out_width), jnp.float32),
        grid=grid,
        in_specs=in_specs,
        out_specs=pl.BlockSpec((tb, out_width), lambda i: (i, 0)),
        compiler_params=pltpu.CompilerParams(
            dimension_semantics=("parallel",),
        ),
    )(inp_p, batch_p, *flat_params)

    rep = out[:B, :h_last]
    lib = out[:B, 2 * h_last:2 * h_last + 1]
    return rep, lib


# ---------------------------------------------------------------------------
# Parameter construction (deterministic, synthetic)
# ---------------------------------------------------------------------------
def init_fcnn_params(key, dims):
    """dims = [d0, d1, ..., dn]; one (Linear, LayerNorm) pair per transition."""
    params = []
    for i in range(len(dims) - 1):
        key, kw, kb = jax.random.split(key, 3)
        din, dout = dims[i], dims[i + 1]
        scale = 1.0 / jnp.sqrt(jnp.float32(din))
        w = jax.random.uniform(kw, (din, dout), jnp.float32, -scale, scale)
        b = jax.random.uniform(kb, (1, dout), jnp.float32, -scale, scale)
        gamma = jnp.ones((1, dout), jnp.float32)
        beta = jnp.zeros((1, dout), jnp.float32)
        params.append((w, b, gamma, beta))
    return key, params


def init_input_module_params(key, input_dim, input_batch_num, hidden_layer):
    d0 = input_dim + input_batch_num
    dims = [d0] + list(hidden_layer)
    key, rep_params = init_fcnn_params(key, dims)
    key, lib_fcnn_params = init_fcnn_params(key, dims)
    key, kw, kb = jax.random.split(key, 3)
    h_last = hidden_layer[-1]
    scale = 1.0 / jnp.sqrt(jnp.float32(h_last))
    lib_head_w = jax.random.uniform(kw, (h_last, 1), jnp.float32, -scale, scale)
    lib_head_b = jax.random.uniform(kb, (1, 1), jnp.float32, -scale, scale)
    return {
        "rep": rep_params,
        "lib_fcnn": lib_fcnn_params,
        "lib_head": (lib_head_w, lib_head_b),
    }


# ---------------------------------------------------------------------------
# Pure-JAX reference for sanity checking
# ---------------------------------------------------------------------------
def _reference_forward(params, inp, input_batch):
    x = jnp.concatenate([inp, input_batch], axis=1)

    def stack(h, ps):
        for (w, b, g, beta) in ps:
            y = h @ w + b
            mean = jnp.mean(y, axis=-1, keepdims=True)
            var = jnp.mean((y - mean) ** 2, axis=-1, keepdims=True)
            y = (y - mean) * jax.lax.rsqrt(var + LN_EPS) * g + beta
            h = jnp.maximum(y, 0.0)
        return h

    rep = stack(x, params["rep"])
    lib = stack(x, params["lib_fcnn"]) @ params["lib_head"][0] + params["lib_head"][1]
    return rep, lib


if __name__ == "__main__":
    input_dim = 32
    input_batch_num = 4
    hidden_layer = [64, 32]

    key = jax.random.PRNGKey(0)
    key, k_in, k_batch = jax.random.split(key, 3)
    params = init_input_module_params(key, input_dim, input_batch_num, hidden_layer)

    # --- case 1: B = 8, single grid step ---
    B = 8
    inp = jax.random.normal(k_in, (B, input_dim), jnp.float32)
    batch_ids = jax.random.randint(k_batch, (B,), 0, input_batch_num)
    input_batch = jax.nn.one_hot(batch_ids, input_batch_num, dtype=jnp.float32)

    fwd = jax.jit(functools.partial(input_module_forward, params))
    latent_rep, latent_lib = fwd(inp, input_batch)
    jax.block_until_ready((latent_rep, latent_lib))

    ref_rep, ref_lib = _reference_forward(params, inp, input_batch)
    assert latent_rep.shape == (B, hidden_layer[-1])
    assert latent_lib.shape == (B, 1)
    assert jnp.allclose(latent_rep, ref_rep, atol=1e-4, rtol=1e-4)
    assert jnp.allclose(latent_lib, ref_lib, atol=1e-4, rtol=1e-4)

    # --- case 2: B = 20 with explicit tile_b=8 -> padded batch, 3-step parallel grid ---
    B2 = 20
    key, k_in2, k_batch2 = jax.random.split(key, 3)
    inp2 = jax.random.normal(k_in2, (B2, input_dim), jnp.float32)
    batch_ids2 = jax.random.randint(k_batch2, (B2,), 0, input_batch_num)
    input_batch2 = jax.nn.one_hot(batch_ids2, input_batch_num, dtype=jnp.float32)

    fwd2 = jax.jit(functools.partial(input_module_forward, params, tile_b=8))
    rep2, lib2 = fwd2(inp2, input_batch2)
    jax.block_until_ready((rep2, lib2))
    ref_rep2, ref_lib2 = _reference_forward(params, inp2, input_batch2)
    assert jnp.allclose(rep2, ref_rep2, atol=1e-4, rtol=1e-4)
    assert jnp.allclose(lib2, ref_lib2, atol=1e-4, rtol=1e-4)

    # --- case 3: B = 200 with default adaptive tiling (>=2 steps for v7x, padded) ---
    B3 = 200
    key, k_in3, k_batch3 = jax.random.split(key, 3)
    inp3 = jax.random.normal(k_in3, (B3, input_dim), jnp.float32)
    batch_ids3 = jax.random.randint(k_batch3, (B3,), 0, input_batch_num)
    input_batch3 = jax.nn.one_hot(batch_ids3, input_batch_num, dtype=jnp.float32)

    fwd3 = jax.jit(functools.partial(input_module_forward, params))
    rep3, lib3 = fwd3(inp3, input_batch3)
    jax.block_until_ready((rep3, lib3))
    ref_rep3, ref_lib3 = _reference_forward(params, inp3, input_batch3)
    assert rep3.shape == (B3, hidden_layer[-1])
    assert lib3.shape == (B3, 1)
    assert jnp.allclose(rep3, ref_rep3, atol=1e-4, rtol=1e-4)
    assert jnp.allclose(lib3, ref_lib3, atol=1e-4, rtol=1e-4)

    print("KERNEL_OK")
</pallas_src>

<mosaic_0001>
module attributes {stable_mosaic.version = 11 : i64} {
  func.func @kernel(%arg0: i32, %arg1: memref<8x32xf32, #tpu.memory_space<vmem>>, %arg2: memref<8x4xf32, #tpu.memory_space<vmem>>, %arg3: memref<32x128xf32, #tpu.memory_space<vmem>>, %arg4: memref<4x128xf32, #tpu.memory_space<vmem>>, %arg5: memref<3x128xf32, #tpu.memory_space<vmem>>, %arg6: memref<128x128xf32, #tpu.memory_space<vmem>>, %arg7: memref<3x128xf32, #tpu.memory_space<vmem>>, %arg8: memref<2x128xf32, #tpu.memory_space<vmem>>, %arg9: memref<8x128xf32, #tpu.memory_space<vmem>>) attributes {dimension_semantics = [#tpu.dimension_semantics<parallel>], iteration_bounds = array<i64: 1>, scalar_prefetch = 0 : i64, scratch_operands = 0 : i64, tpu.core_type = #tpu.core_type<tc>, window_params = [{transform_indices = @transform_0, window_bounds = array<i64: 8, 32>}, {transform_indices = @transform_1, window_bounds = array<i64: 8, 4>}, {pipeline_mode = #tpu.pipeline_mode<synchronous>, transform_indices = @transform_2, window_bounds = array<i64: 32, 128>}, {pipeline_mode = #tpu.pipeline_mode<synchronous>, transform_indices = @transform_3, window_bounds = array<i64: 4, 128>}, {pipeline_mode = #tpu.pipeline_mode<synchronous>, transform_indices = @transform_4, window_bounds = array<i64: 3, 128>}, {pipeline_mode = #tpu.pipeline_mode<synchronous>, transform_indices = @transform_5, window_bounds = array<i64: 128, 128>}, {pipeline_mode = #tpu.pipeline_mode<synchronous>, transform_indices = @transform_6, window_bounds = array<i64: 3, 128>}, {pipeline_mode = #tpu.pipeline_mode<synchronous>, transform_indices = @transform_7, window_bounds = array<i64: 2, 128>}, {transform_indices = @transform_8, window_bounds = array<i64: 8, 128>}]} {
    %c0 = arith.constant 0 : index
    %c0_0 = arith.constant 0 : index
    %0 = vector.load %arg1[%c0, %c0_0] : memref<8x32xf32, #tpu.memory_space<vmem>>, vector<8x32xf32>
    %c0_1 = arith.constant 0 : index
    %c0_2 = arith.constant 0 : index
    %1 = vector.load %arg2[%c0_1, %c0_2] : memref<8x4xf32, #tpu.memory_space<vmem>>, vector<8x4xf32>
    %c0_3 = arith.constant 0 : index
    %c0_4 = arith.constant 0 : index
    %2 = vector.load %arg3[%c0_3, %c0_4] : memref<32x128xf32, #tpu.memory_space<vmem>>, vector<32x128xf32>
    %c0_5 = arith.constant 0 : index
    %c0_6 = arith.constant 0 : index
    %3 = vector.load %arg4[%c0_5, %c0_6] : memref<4x128xf32, #tpu.memory_space<vmem>>, vector<4x128xf32>
    %c0_7 = arith.constant 0 : index
    %c0_8 = arith.constant 0 : index
    %4 = vector.load %arg5[%c0_7, %c0_8] : memref<3x128xf32, #tpu.memory_space<vmem>>, vector<3x128xf32>
    %cst = arith.constant dense<0.000000e+00> : vector<8x128xf32>
    %5 = tpu.matmul %0, %2, %cst {dimension_numbers = #tpu.dot_dimension_numbers<[1], [0], [0], [1], [0, 0, 1, 1], [], []>} : vector<8x32xf32>, vector<32x128xf32>, vector<8x128xf32> -> vector<8x128xf32>
    %6 = vector.extract_strided_slice %1 {offsets = [0, 0], sizes = [8, 1], strides = [1, 1]} : vector<8x4xf32> to vector<8x1xf32>
    %7 = vector.extract_strided_slice %3 {offsets = [0, 0], sizes = [1, 128], strides = [1, 1]} : vector<4x128xf32> to vector<1x128xf32>
    %8 = vector.broadcast %6 : vector<8x1xf32> to vector<8x128xf32>
    %9 = vector.broadcast %7 : vector<1x128xf32> to vector<8x128xf32>
    %10 = arith.mulf %8, %9 : vector<8x128xf32>
    %11 = arith.addf %5, %10 : vector<8x128xf32>
    %12 = vector.extract_strided_slice %1 {offsets = [0, 1], sizes = [8, 1], strides = [1, 1]} : vector<8x4xf32> to vector<8x1xf32>
    %13 = vector.extract_strided_slice %3 {offsets = [1, 0], sizes = [1, 128], strides = [1, 1]} : vector<4x128xf32> to vector<1x128xf32>
    %14 = vector.broadcast %12 : vector<8x1xf32> to vector<8x128xf32>
    %15 = vector.broadcast %13 : vector<1x128xf32> to vector<8x128xf32>
    %16 = arith.mulf %14, %15 : vector<8x128xf32>
    %17 = arith.addf %11, %16 : vector<8x128xf32>
    %18 = vector.extract_strided_slice %1 {offsets = [0, 2], sizes = [8, 1], strides = [1, 1]} : vector<8x4xf32> to vector<8x1xf32>
    %19 = vector.extract_strided_slice %3 {offsets = [2, 0], sizes = [1, 128], strides = [1, 1]} : vector<4x128xf32> to vector<1x128xf32>
    %20 = vector.broadcast %18 : vector<8x1xf32> to vector<8x128xf32>
    %21 = vector.broadcast %19 : vector<1x128xf32> to vector<8x128xf32>
    %22 = arith.mulf %20, %21 : vector<8x128xf32>
    %23 = arith.addf %17, %22 : vector<8x128xf32>
    %24 = vector.extract_strided_slice %1 {offsets = [0, 3], sizes = [8, 1], strides = [1, 1]} : vector<8x4xf32> to vector<8x1xf32>
    %25 = vector.extract_strided_slice %3 {offsets = [3, 0], sizes = [1, 128], strides = [1, 1]} : vector<4x128xf32> to vector<1x128xf32>
    %26 = vector.broadcast %24 : vector<8x1xf32> to vector<8x128xf32>
    %27 = vector.broadcast %25 : vector<1x128xf32> to vector<8x128xf32>
    %28 = arith.mulf %26, %27 : vector<8x128xf32>
    %29 = arith.addf %23, %28 : vector<8x128xf32>
    %30 = vector.extract_strided_slice %4 {offsets = [0, 0], sizes = [1, 128], strides = [1, 1]} : vector<3x128xf32> to vector<1x128xf32>
    %31 = vector.broadcast %30 : vector<1x128xf32> to vector<8x128xf32>
    %32 = arith.addf %29, %31 : vector<8x128xf32>
    %33 = vector.extract_strided_slice %4 {offsets = [1, 0], sizes = [1, 128], strides = [1, 1]} : vector<3x128xf32> to vector<1x128xf32>
    %34 = vector.extract_strided_slice %4 {offsets = [2, 0], sizes = [1, 128], strides = [1, 1]} : vector<3x128xf32> to vector<1x128xf32>
    %35 = tpu.iota {dimensions = array<i32: 1>} : vector<8x128xi32>
    %c64_i32 = arith.constant 64 : i32
    %36 = vector.broadcast %c64_i32 : i32 to vector<8x128xi32>
    %37 = arith.cmpi slt, %35, %36 : vector<8x128xi32>
    %c64_i32_9 = arith.constant 64 : i32
    %38 = vector.broadcast %c64_i32_9 : i32 to vector<8x128xi32>
    %39 = arith.cmpi sge, %35, %38 : vector<8x128xi32>
    %c128_i32 = arith.constant 128 : i32
    %40 = vector.broadcast %c128_i32 : i32 to vector<8x128xi32>
    %41 = arith.cmpi slt, %35, %40 : vector<8x128xi32>
    %42 = arith.andi %39, %41 : vector<8x128xi1>
    %cst_10 = arith.constant 0.000000e+00 : f32
    %43 = vector.broadcast %cst_10 : f32 to vector<8x128xf32>
    %44 = arith.select %37, %32, %43 : vector<8x128xi1>, vector<8x128xf32>
    %cst_11 = arith.constant dense<0.000000e+00> : vector<8xf32>
    %45 = vector.multi_reduction <add>, %44, %cst_11 [1] : vector<8x128xf32> to vector<8xf32>
    %46 = vector.shape_cast %45 : vector<8xf32> to vector<8x1xf32>
    %47 = arith.select %42, %32, %43 : vector<8x128xi1>, vector<8x128xf32>
    %cst_12 = arith.constant dense<0.000000e+00> : vector<8xf32>
    %48 = vector.multi_reduction <add>, %47, %cst_12 [1] : vector<8x128xf32> to vector<8xf32>
    %49 = vector.shape_cast %48 : vector<8xf32> to vector<8x1xf32>
    %50 = vector.shape_cast %46 : vector<8x1xf32> to vector<8x1xf32>
    %51 = vector.broadcast %50 : vector<8x1xf32> to vector<8x128xf32>
    %52 = vector.shape_cast %49 : vector<8x1xf32> to vector<8x1xf32>
    %53 = vector.broadcast %52 : vector<8x1xf32> to vector<8x128xf32>
    %54 = arith.select %37, %51, %53 : vector<8x128xi1>, vector<8x128xf32>
    %cst_13 = arith.constant 1.562500e-02 : f32
    %55 = vector.broadcast %cst_13 : f32 to vector<8x128xf32>
    %56 = arith.mulf %54, %55 : vector<8x128xf32>
    %57 = arith.subf %32, %56 : vector<8x128xf32>
    %58 = arith.mulf %57, %57 : vector<8x128xf32>
    %59 = arith.select %37, %58, %43 : vector<8x128xi1>, vector<8x128xf32>
    %cst_14 = arith.constant dense<0.000000e+00> : vector<8xf32>
    %60 = vector.multi_reduction <add>, %59, %cst_14 [1] : vector<8x128xf32> to vector<8xf32>
    %61 = vector.shape_cast %60 : vector<8xf32> to vector<8x1xf32>
    %62 = arith.select %42, %58, %43 : vector<8x128xi1>, vector<8x128xf32>
    %cst_15 = arith.constant dense<0.000000e+00> : vector<8xf32>
    %63 = vector.multi_reduction <add>, %62, %cst_15 [1] : vector<8x128xf32> to vector<8xf32>
    %64 = vector.shape_cast %63 : vector<8xf32> to vector<8x1xf32>
    %65 = vector.shape_cast %61 : vector<8x1xf32> to vector<8x1xf32>
    %66 = vector.broadcast %65 : vector<8x1xf32> to vector<8x128xf32>
    %67 = vector.shape_cast %64 : vector<8x1xf32> to vector<8x1xf32>
    %68 = vector.broadcast %67 : vector<8x1xf32> to vector<8x128xf32>
    %69 = arith.select %37, %66, %68 : vector<8x128xi1>, vector<8x128xf32>
    %cst_16 = arith.constant 1.562500e-02 : f32
    %70 = vector.broadcast %cst_16 : f32 to vector<8x128xf32>
    %71 = arith.mulf %69, %70 : vector<8x128xf32>
    %cst_17 = arith.constant 9.99999974E-6 : f32
    %72 = vector.broadcast %cst_17 : f32 to vector<8x128xf32>
    %73 = arith.addf %71, %72 : vector<8x128xf32>
    %74 = math.rsqrt %73 : vector<8x128xf32>
    %75 = arith.mulf %57, %74 : vector<8x128xf32>
    %76 = vector.broadcast %33 : vector<1x128xf32> to vector<8x128xf32>
    %77 = arith.mulf %75, %76 : vector<8x128xf32>
    %78 = vector.broadcast %34 : vector<1x128xf32> to vector<8x128xf32>
    %79 = arith.addf %77, %78 : vector<8x128xf32>
    %cst_18 = arith.constant 0.000000e+00 : f32
    %80 = vector.broadcast %cst_18 : f32 to vector<8x128xf32>
    %81 = arith.maximumf %79, %80 : vector<8x128xf32>
    %c0_19 = arith.constant 0 : index
    %c0_20 = arith.constant 0 : index
    %82 = vector.load %arg6[%c0_19, %c0_20] : memref<128x128xf32, #tpu.memory_space<vmem>>, vector<128x128xf32>
    %c0_21 = arith.constant 0 : index
    %c0_22 = arith.constant 0 : index
    %83 = vector.load %arg7[%c0_21, %c0_22] : memref<3x128xf32, #tpu.memory_space<vmem>>, vector<3x128xf32>
    %cst_23 = arith.constant dense<0.000000e+00> : vector<8x128xf32>
    %84 = tpu.matmul %81, %82, %cst_23 {dimension_numbers = #tpu.dot_dimension_numbers<[1], [0], [0], [1], [0, 0, 1, 1], [], []>} : vector<8x128xf32>, vector<128x128xf32>, vector<8x128xf32> -> vector<8x128xf32>
    %85 = vector.extract_strided_slice %83 {offsets = [0, 0], sizes = [1, 128], strides = [1, 1]} : vector<3x128xf32> to vector<1x128xf32>
    %86 = vector.broadcast %85 : vector<1x128xf32> to vector<8x128xf32>
    %87 = arith.addf %84, %86 : vector<8x128xf32>
    %88 = vector.extract_strided_slice %83 {offsets = [1, 0], sizes = [1, 128], strides = [1, 1]} : vector<3x128xf32> to vector<1x128xf32>
    %89 = vector.extract_strided_slice %83 {offsets = [2, 0], sizes = [1, 128], strides = [1, 1]} : vector<3x128xf32> to vector<1x128xf32>
    %90 = tpu.iota {dimensions = array<i32: 1>} : vector<8x128xi32>
    %c32_i32 = arith.constant 32 : i32
    %91 = vector.broadcast %c32_i32 : i32 to vector<8x128xi32>
    %92 = arith.cmpi slt, %90, %91 : vector<8x128xi32>
    %c32_i32_24 = arith.constant 32 : i32
    %93 = vector.broadcast %c32_i32_24 : i32 to vector<8x128xi32>
    %94 = arith.cmpi sge, %90, %93 : vector<8x128xi32>
    %c64_i32_25 = arith.constant 64 : i32
    %95 = vector.broadcast %c64_i32_25 : i32 to vector<8x128xi32>
    %96 = arith.cmpi slt, %90, %95 : vector<8x128xi32>
    %97 = arith.andi %94, %96 : vector<8x128xi1>
    %cst_26 = arith.constant 0.000000e+00 : f32
    %98 = vector.broadcast %cst_26 : f32 to vector<8x128xf32>
    %99 = arith.select %92, %87, %98 : vector<8x128xi1>, vector<8x128xf32>
    %cst_27 = arith.constant dense<0.000000e+00> : vector<8xf32>
    %100 = vector.multi_reduction <add>, %99, %cst_27 [1] : vector<8x128xf32> to vector<8xf32>
    %101 = vector.shape_cast %100 : vector<8xf32> to vector<8x1xf32>
    %102 = arith.select %97, %87, %98 : vector<8x128xi1>, vector<8x128xf32>
    %cst_28 = arith.constant dense<0.000000e+00> : vector<8xf32>
    %103 = vector.multi_reduction <add>, %102, %cst_28 [1] : vector<8x128xf32> to vector<8xf32>
    %104 = vector.shape_cast %103 : vector<8xf32> to vector<8x1xf32>
    %105 = vector.shape_cast %101 : vector<8x1xf32> to vector<8x1xf32>
    %106 = vector.broadcast %105 : vector<8x1xf32> to vector<8x128xf32>
    %107 = vector.shape_cast %104 : vector<8x1xf32> to vector<8x1xf32>
    %108 = vector.broadcast %107 : vector<8x1xf32> to vector<8x128xf32>
    %109 = arith.select %92, %106, %108 : vector<8x128xi1>, vector<8x128xf32>
    %cst_29 = arith.constant 3.125000e-02 : f32
    %110 = vector.broadcast %cst_29 : f32 to vector<8x128xf32>
    %111 = arith.mulf %109, %110 : vector<8x128xf32>
    %112 = arith.subf %87, %111 : vector<8x128xf32>
    %113 = arith.mulf %112, %112 : vector<8x128xf32>
    %114 = arith.select %92, %113, %98 : vector<8x128xi1>, vector<8x128xf32>
    %cst_30 = arith.constant dense<0.000000e+00> : vector<8xf32>
    %115 = vector.multi_reduction <add>, %114, %cst_30 [1] : vector<8x128xf32> to vector<8xf32>
    %116 = vector.shape_cast %115 : vector<8xf32> to vector<8x1xf32>
    %117 = arith.select %97, %113, %98 : vector<8x128xi1>, vector<8x128xf32>
    %cst_31 = arith.constant dense<0.000000e+00> : vector<8xf32>
    %118 = vector.multi_reduction <add>, %117, %cst_31 [1] : vector<8x128xf32> to vector<8xf32>
    %119 = vector.shape_cast %118 : vector<8xf32> to vector<8x1xf32>
    %120 = vector.shape_cast %116 : vector<8x1xf32> to vector<8x1xf32>
    %121 = vector.broadcast %120 : vector<8x1xf32> to vector<8x128xf32>
    %122 = vector.shape_cast %119 : vector<8x1xf32> to vector<8x1xf32>
    %123 = vector.broadcast %122 : vector<8x1xf32> to vector<8x128xf32>
    %124 = arith.select %92, %121, %123 : vector<8x128xi1>, vector<8x128xf32>
    %cst_32 = arith.constant 3.125000e-02 : f32
    %125 = vector.broadcast %cst_32 : f32 to vector<8x128xf32>
    %126 = arith.mulf %124, %125 : vector<8x128xf32>
    %cst_33 = arith.constant 9.99999974E-6 : f32
    %127 = vector.broadcast %cst_33 : f32 to vector<8x128xf32>
    %128 = arith.addf %126, %127 : vector<8x128xf32>
    %129 = math.rsqrt %128 : vector<8x128xf32>
    %130 = arith.mulf %112, %129 : vector<8x128xf32>
    %131 = vector.broadcast %88 : vector<1x128xf32> to vector<8x128xf32>
    %132 = arith.mulf %130, %131 : vector<8x128xf32>
    %133 = vector.broadcast %89 : vector<1x128xf32> to vector<8x128xf32>
    %134 = arith.addf %132, %133 : vector<8x128xf32>
    %cst_34 = arith.constant 0.000000e+00 : f32
    %135 = vector.broadcast %cst_34 : f32 to vector<8x128xf32>
    %136 = arith.maximumf %134, %135 : vector<8x128xf32>
    %c0_35 = arith.constant 0 : index
    %c0_36 = arith.constant 0 : index
    %137 = vector.load %arg8[%c0_35, %c0_36] : memref<2x128xf32, #tpu.memory_space<vmem>>, vector<2x128xf32>
    %138 = vector.extract_strided_slice %137 {offsets = [0, 0], sizes = [1, 128], strides = [1, 1]} : vector<2x128xf32> to vector<1x128xf32>
    %139 = vector.broadcast %138 : vector<1x128xf32> to vector<8x128xf32>
    %140 = arith.mulf %136, %139 : vector<8x128xf32>
    %cst_37 = arith.constant dense<0.000000e+00> : vector<8xf32>
    %141 = vector.multi_reduction <add>, %140, %cst_37 [1] : vector<8x128xf32> to vector<8xf32>
    %142 = vector.shape_cast %141 : vector<8xf32> to vector<8x1xf32>
    %143 = vector.extract_strided_slice %137 {offsets = [1, 0], sizes = [1, 1], strides = [1, 1]} : vector<2x128xf32> to vector<1x1xf32>
    %144 = vector.broadcast %143 : vector<1x1xf32> to vector<8x1xf32>
    %145 = arith.addf %142, %144 : vector<8x1xf32>
    %146 = tpu.iota {dimensions = array<i32: 1>} : vector<8x128xi32>
    %c64_i32_38 = arith.constant 64 : i32
    %147 = vector.broadcast %c64_i32_38 : i32 to vector<8x128xi32>
    %148 = arith.cmpi eq, %146, %147 : vector<8x128xi32>
    %149 = vector.shape_cast %145 : vector<8x1xf32> to vector<8x1xf32>
    %150 = vector.broadcast %149 : vector<8x1xf32> to vector<8x128xf32>
    %151 = arith.select %148, %150, %136 : vector<8x128xi1>, vector<8x128xf32>
    %c0_39 = arith.constant 0 : index
    %c0_40 = arith.constant 0 : index
    %152 = vector.load %arg9[%c0_39, %c0_40] : memref<8x128xf32, #tpu.memory_space<vmem>>, vector<8x128xf32>
    tpu.vector_store %arg9[%c0_39, %c0_40], %151 {strides = array<i32>} : memref<8x128xf32, #tpu.memory_space<vmem>>, vector<8x128xf32>,
    return
  }
  func.func @transform_0(%arg0: i32) -> (i32, i32) {
    %c0_i32 = arith.constant 0 : i32
    %c0_i32_0 = arith.constant 0 : i32
    return %arg0, %c0_i32 : i32, i32
  }
  func.func @transform_1(%arg0: i32) -> (i32, i32) {
    %c0_i32 = arith.constant 0 : i32
    %c0_i32_0 = arith.constant 0 : i32
    return %arg0, %c0_i32 : i32, i32
  }
  func.func @transform_2(%arg0: i32) -> (i32, i32) {
    %c0_i32 = arith.constant 0 : i32
    %c0_i32_0 = arith.constant 0 : i32
    %c0_i32_1 = arith.constant 0 : i32
    return %c0_i32, %c0_i32_0 : i32, i32
  }
  func.func @transform_3(%arg0: i32) -> (i32, i32) {
    %c0_i32 = arith.constant 0 : i32
    %c0_i32_0 = arith.constant 0 : i32
    %c0_i32_1 = arith.constant 0 : i32
    return %c0_i32, %c0_i32_0 : i32, i32
  }
  func.func @transform_4(%arg0: i32) -> (i32, i32) {
    %c0_i32 = arith.constant 0 : i32
    %c0_i32_0 = arith.constant 0 : i32
    %c0_i32_1 = arith.constant 0 : i32
    return %c0_i32, %c0_i32_0 : i32, i32
  }
  func.func @transform_5(%arg0: i32) -> (i32, i32) {
    %c0_i32 = arith.constant 0 : i32
    %c0_i32_0 = arith.constant 0 : i32
    %c0_i32_1 = arith.constant 0 : i32
    return %c0_i32, %c0_i32_0 : i32, i32
  }
  func.func @transform_6(%arg0: i32) -> (i32, i32) {
    %c0_i32 = arith.constant 0 : i32
    %c0_i32_0 = arith.constant 0 : i32
    %c0_i32_1 = arith.constant 0 : i32
    return %c0_i32, %c0_i32_0 : i32, i32
  }
  func.func @transform_7(%arg0: i32) -> (i32, i32) {
    %c0_i32 = arith.constant 0 : i32
    %c0_i32_0 = arith.constant 0 : i32
    %c0_i32_1 = arith.constant 0 : i32
    return %c0_i32, %c0_i32_0 : i32, i32
  }
  func.func @transform_8(%arg0: i32) -> (i32, i32) {
    %c0_i32 = arith.constant 0 : i32
    %c0_i32_0 = arith.constant 0 : i32
    return %arg0, %c0_i32 : i32, i32
  }
}

</mosaic_0001>

<llo_original>
// kernel: input_module_forward.1
$region0: #{input_module_forward.1}
  #allocation0 [shape = 'u32[]', space=smem, size = 0x4, offset = 0x4, fixed_abs, tag = 'smem constant byte address 0x4 - core index']
  #allocation1 [shape = 'u32[144,128]{1,0:T(1,128)}', space=vmem, size = 0x12000, scoped, tag = 'internal scratch']
  %s0 = inlined_call_operand.vmem [shape: f32[8,32], index: 0, kind: input, shape index: {}]
  %s1 = inlined_call_operand.vmem [shape: f32[8,4], index: 1, kind: input, shape index: {}]
  %s2 = inlined_call_operand.vmem [shape: f32[32,128], index: 2, kind: input, shape index: {}]
  %s3 = inlined_call_operand.vmem [shape: f32[4,128], index: 3, kind: input, shape index: {}]
  %s4 = inlined_call_operand.vmem [shape: f32[3,128], index: 4, kind: input, shape index: {}]
  %s5 = inlined_call_operand.hbm [shape: f32[128,128], index: 5, kind: input, shape index: {}]
  %s6 = inlined_call_operand.vmem [shape: f32[3,128], index: 6, kind: input, shape index: {}]
  %s7 = inlined_call_operand.vmem [shape: f32[2,128], index: 7, kind: input, shape index: {}]
  %s8 = inlined_call_operand.vmem [shape: f32[8,128], index: 8, kind: output, shape index: {}]
  %s9 = sld [smem:[#allocation0]]
  $region46: #{input_module_forward.1} parent=0
    _
  %s11 = ssub.s32 1, %s9
  %s12 = scalar_select 0, %s11, %s9
  $region1: #{input_module_forward.1} parent=0
    #allocation2 [shape = 'u8[65536]{0}', space=vmem, size = 0x10000, scoped, tag = 'input window, operand 5, single buffered']
    #allocation3 [shape = 's32[1]{0}', space=sflag, size = 0x4, scoped, tag = 'scoped memory for input_module_forward.1']
    %13 = vsyncpa [#allocation3], 0
    // Predicated region
    $region2: #{input_module_forward.1} parent=1 // pred_check
      _
    $region3: #{input_module_forward.1} parent=1 // pred_check_branch
      %15 = sbr.rel (0) target = $region5
    $region4: #{input_module_forward.1} parent=1 // pred_region
      _
    $region5: #{input_module_forward.1} parent=1 // pred_fallthru
      _
    // Predicated region
    $region6: #{input_module_forward.1} parent=1 // pred_check
      _
    $region7: #{input_module_forward.1} parent=1 // pred_check_branch
      %17 = sbr.rel (0) target = $region9
    $region8: #{input_module_forward.1} parent=1 // pred_region
      _
    $region9: #{input_module_forward.1} parent=1 // pred_fallthru
      _
    // Predicated region
    $region10: #{input_module_forward.1} parent=1 // pred_check
      _
    $region11: #{input_module_forward.1} parent=1 // pred_check_branch
      %19 = sbr.rel (0) target = $region13
    $region12: #{input_module_forward.1} parent=1 // pred_region
      _
    $region13: #{input_module_forward.1} parent=1 // pred_fallthru
      _
    // Predicated region
    $region14: #{input_module_forward.1} parent=1 // pred_check
      _
    $region15: #{input_module_forward.1} parent=1 // pred_check_branch
      %21 = sbr.rel (0) target = $region17
    $region16: #{input_module_forward.1} parent=1 // pred_region
      _
    $region17: #{input_module_forward.1} parent=1 // pred_fallthru
      _
    // Predicated region
    $region18: #{input_module_forward.1} parent=1 // pred_check
      _
    $region19: #{input_module_forward.1} parent=1 // pred_check_branch
      %23 = sbr.rel (0) target = $region21
    $region20: #{input_module_forward.1} parent=1 // pred_region
      _
    $region21: #{input_module_forward.1} parent=1 // pred_fallthru
      _
    // Predicated region
    $region22: #{input_module_forward.1} parent=1 // pred_check
      _
    $region23: #{input_module_forward.1} parent=1 // pred_check_branch
      %25 = sbr.rel (0) target = $region25
    $region24: #{input_module_forward.1} parent=1 // pred_region
      %s27 = ssub.s32 2048, 2048
      %28 = vsyncadd [#allocation3], %s27
      %s29 = sshll.u32 [#allocation2], 4
      %s30 = int_to_ptr.vmem [resolvable:$true] %s29
      %35 = dma.hbm_to_vmem [thread:$0]  %s5, 2048, %s30, [#allocation3], 128, 128, 8
    $region25: #{input_module_forward.1} parent=1 // pred_fallthru
      _
    // Predicated region
    $region26: #{input_module_forward.1} parent=1 // pred_check
      _
    $region27: #{input_module_forward.1} parent=1 // pred_check_branch
      %37 = sbr.rel (0) target = $region29
    $region28: #{input_module_forward.1} parent=1 // pred_region
      _
    $region29: #{input_module_forward.1} parent=1 // pred_fallthru
      _
    // Predicated region
    $region30: #{input_module_forward.1} parent=1 // pred_check
      _
    $region31: #{input_module_forward.1} parent=1 // pred_check_branch
      %39 = sbr.rel (0) target = $region33
    $region32: #{input_module_forward.1} parent=1 // pred_region
      _
    $region33: #{input_module_forward.1} parent=1 // pred_fallthru
      _
    // Predicated region
    $region34: #{input_module_forward.1} parent=1 // pred_check
      _
    $region35: #{input_module_forward.1} parent=1 // pred_check_branch
      %41 = sbr.rel (0) target = $region37
    $region36: #{input_module_forward.1} parent=1 // pred_region
      %42 = dma.done [#allocation3], 2048
    $region37: #{input_module_forward.1} parent=1 // pred_fallthru
      _
    %v43 = vld [vmem:[%s0] sm:$0xff]
    %v44 = vld [vmem:[%s1] sm:$0xff]
    %v45 = vld [vmem:[%s2] sm:$0xff]
    %v46 = vld [vmem:[%s2 + $0x8] sm:$0xff]
    %v47 = vld [vmem:[%s2 + $0x10] sm:$0xff]
    %v48 = vld [vmem:[%s2 + $0x18] sm:$0xff]
    %v49 = vld [vmem:[%s3] sm:$0xf]
    %v50 = vld [vmem:[%s4] sm:$0x7]
    %52 = vset.pattern.permute.xlu0 0
    %53 = vperm.xlu0 %52, %v44
    %v54 = vpop.permute.xlu0 %53
    %v56 = vlaneseq
    %v57 = vshrl.u32 %v56, 7
    %v58 = vsub.s32 0, %v57
    %v59 = vrot.slane %v49, %v58
    %v60 = vmul.f32 %v54, %v59
    %vm61 = vcmask 261120
    %v63 = vsel %vm61, %v43, 0
    %65 = vmatprep.subr.mxu0 0.0
    %66 = vmatpush1.msra.mxu0 %v45
    %67 = vmatprep.subr.mxu0 0.0
    %68 = vmatpush1.msra.mxu0 %v46
    %69 = vmatprep.subr.mxu0 0.0
    %70 = vmatpush1.msra.mxu0 %v47
    %71 = vmatprep.subr.mxu0 0.0
    %72 = vmatpush1.msra.mxu0 %v48
    %73 = vmatprep.subr.mxu0 0.0
    %74 = vmatpush1.msra.mxu0 0.0
    %75 = vmatprep.subr.mxu0 0.0
    %76 = vmatpush1.msra.mxu0 0.0
    %77 = vmatprep.subr.mxu0 0.0
    %78 = vmatpush1.msra.mxu0 0.0
    %79 = vmatprep.subr.mxu0 0.0
    %80 = vmatpush1.msra.mxu0 0.0
    %81 = vmatprep.subr.mxu0 0.0
    %82 = vmatpush1.msra.mxu0 0.0
    %83 = vmatprep.subr.mxu0 0.0
    %84 = vmatpush1.msra.mxu0 0.0
    %85 = vmatprep.subr.mxu0 0.0
    %86 = vmatpush1.msra.mxu0 0.0
    %87 = vmatprep.subr.mxu0 0.0
    %88 = vmatpush1.msra.mxu0 0.0
    %89 = vmatprep.subr.mxu0 0.0
    %90 = vmatpush1.msra.mxu0 0.0
    %91 = vmatprep.subr.mxu0 0.0
    %92 = vmatpush1.msra.mxu0 0.0
    %93 = vmatprep.subr.mxu0 0.0
    %94 = vmatpush1.msra.mxu0 0.0
    %95 = vmatprep.subr.mxu0 0.0
    %96 = vmatpush1.msra.mxu0 0.0
    %97 = vmatprep.subr.mxu0 0.0
    %98 = vmatpush1.msra.mxu0 0.0
    %99 = vmatprep.subr.mxu0 0.0
    %100 = vmatpush1.msra.mxu0 0.0
    %101 = vmatprep.subr.mxu0 0.0
    %102 = vmatpush1.msra.mxu0 0.0
    %103 = vmatprep.subr.mxu0 0.0
    %104 = vmatpush1.msra.mxu0 0.0
    %105 = vmatprep.subr.mxu0 0.0
    %106 = vmatpush1.msra.mxu0 0.0
    %107 = vmatprep.subr.mxu0 0.0
    %108 = vmatpush1.msra.mxu0 0.0
    %109 = vmatprep.subr.mxu0 0.0
    %110 = vmatpush1.msra.mxu0 0.0
    %111 = vmatprep.subr.mxu0 0.0
    %112 = vmatpush1.msra.mxu0 0.0
    %113 = vmatprep.subr.mxu0 0.0
    %114 = vmatpush1.msra.mxu0 0.0
    %115 = vmatprep.subr.mxu0 0.0
    %116 = vmatpush1.msra.mxu0 0.0
    %117 = vmatprep.subr.mxu0 0.0
    %118 = vmatpush1.msra.mxu0 0.0
    %119 = vmatprep.subr.mxu0 0.0
    %120 = vmatpush1.msra.mxu0 0.0
    %121 = vmatprep.subr.mxu0 0.0
    %122 = vmatpush1.msra.mxu0 0.0
    %123 = vmatprep.subr.mxu0 0.0
    %124 = vmatpush1.msra.mxu0 0.0
    %125 = vmatprep.subr.mxu0 0.0
    %126 = vmatpush1.msra.mxu0 0.0
    %127 = vmatprep.subr.mxu0 0.0
    %128 = vmatpush1.msra.mxu0 0.0
    %129 = vmatprep.mubr.f32.mxu0 0.0
    %130 = vmatmul.mubr.f32.gmra.mrb[0].mxu0 %v63
    %v131 = vpop.f32.mrb[0].mxu0
    %v132 = vadd.f32 %v60, %v131
    %v133 = vpop.f32.mrb[0].mxu0
    %134 = vdwg.mxu0
    %135 = vset.pattern.permute.xlu0 1
    %136 = vperm.xlu0 %135, %v44
    %v137 = vpop.permute.xlu0 %136
    %v139 = vlaneseq
    %v140 = vshrl.u32 %v139, 7
    %v141 = vsub.s32 1, %v140
    %v142 = vrot.slane %v49, %v141
    %v143 = vmul.f32 %v137, %v142
    %v144 = vadd.f32 %v132, %v143
    %145 = vset.pattern.permute.xlu0 2
    %146 = vperm.xlu0 %145, %v44
    %v147 = vpop.permute.xlu0 %146
    %v149 = vlaneseq
    %v150 = vshrl.u32 %v149, 7
    %v151 = vsub.s32 2, %v150
    %v152 = vrot.slane %v49, %v151
    %v153 = vmul.f32 %v147, %v152
    %v154 = vadd.f32 %v144, %v153
    %155 = vset.pattern.permute.xlu0 3
    %156 = vperm.xlu0 %155, %v44
    %v157 = vpop.permute.xlu0 %156
    %v159 = vlaneseq
    %v160 = vshrl.u32 %v159, 7
    %v161 = vsub.s32 3, %v160
    %v162 = vrot.slane %v49, %v161
    %v163 = vmul.f32 %v157, %v162
    %v164 = vadd.f32 %v154, %v163
    %v165 = vlaneseq
    %v166 = vshrl.u32 %v165, 7
    %v167 = vsub.s32 0, %v166
    %v168 = vrot.slane %v50, %v167
    %v169 = vadd.f32 %v164, %v168
    %v170 = vlaneseq
    %v171 = vand.u32 %v170, 127
    %vm172 = vcmp.lt.s32.totalorder %v171, 64
    %vm173 = vcmp.ge.s32.totalorder %v171, 64
    %vm174 = vcmp.lt.s32.totalorder %v171, 128
    %vm175 = vmand %vm173, %vm174
    %v176 = vsel %vm172, %v169, 0.0
    %177 = vadd.xlane.f32.xlu0 %v176
    %v178 = vpop.xlane.xlu0 %177
    %v179 = vsel %vm175, %v169, 0.0
    %180 = vadd.xlane.f32.xlu0 %v179
    %v181 = vpop.xlane.xlu0 %180
    %v182 = vsel %vm172, %v178, %v181
    %v183 = vmul.f32 %v182, 0.015625
    %v184 = vsub.f32 %v169, %v183
    %v185 = vmul.f32 %v184, %v184
    %v186 = vsel %vm172, %v185, 0.0
    %187 = vadd.xlane.f32.xlu0 %v186
    %v188 = vpop.xlane.xlu0 %187
    %v189 = vsel %vm175, %v185, 0.0
    %190 = vadd.xlane.f32.xlu0 %v189
    %v191 = vpop.xlane.xlu0 %190
    %v192 = vsel %vm172, %v188, %v191
    %v193 = vmul.f32 %v192, 0.015625
    %v194 = vadd.f32 %v193, 1e-05
    %v195 = vrsqrt.pop %v194
    %v196 = vmul.f32 %v184, %v195
    %v197 = vlaneseq
    %v198 = vshrl.u32 %v197, 7
    %v199 = vsub.s32 1, %v198
    %v200 = vrot.slane %v50, %v199
    %v201 = vmul.f32 %v196, %v200
    %v202 = vlaneseq
    %v203 = vshrl.u32 %v202, 7
    %v204 = vsub.s32 2, %v203
    %v205 = vrot.slane %v50, %v204
    %v206 = vadd.f32 %v201, %v205
    %v207 = vmax.f32 %v206, 0.0
    %v208 = vld [vmem:[#allocation2] sm:$0xff]
    %v209 = vld [vmem:[#allocation2 + $0x8] sm:$0xff]
    %v210 = vld [vmem:[#allocation2 + $0x10] sm:$0xff]
    %v211 = vld [vmem:[#allocation2 + $0x18] sm:$0xff]
    %v212 = vld [vmem:[#allocation2 + $0x20] sm:$0xff]
    %v213 = vld [vmem:[#allocation2 + $0x28] sm:$0xff]
    %v214 = vld [vmem:[#allocation2 + $0x30] sm:$0xff]
    %v215 = vld [vmem:[#allocation2 + $0x38] sm:$0xff]
    %v216 = vld [vmem:[#allocation2 + $0x40] sm:$0xff]
    %v217 = vld [vmem:[#allocation2 + $0x48] sm:$0xff]
    %v218 = vld [vmem:[#allocation2 + $0x50] sm:$0xff]
    %v219 = vld [vmem:[#allocation2 + $0x58] sm:$0xff]
    %v220 = vld [vmem:[#allocation2 + $0x60] sm:$0xff]
    %v221 = vld [vmem:[#allocation2 + $0x68] sm:$0xff]
    %v222 = vld [vmem:[#allocation2 + $0x70] sm:$0xff]
    %v223 = vld [vmem:[#allocation2 + $0x78] sm:$0xff]
    %v224 = vld [vmem:[%s6] sm:$0x7]
    %v225 = vlaneseq
    %v226 = vshrl.u32 %v225, 7
    %v227 = vsub.s32 0, %v226
    %v228 = vrot.slane %v224, %v227
    %229 = vmatprep.subr.mxu0 0.0
    %230 = vmatpush1.msra.mxu0 %v208
    %231 = vmatprep.subr.mxu0 0.0
    %232 = vmatpush1.msra.mxu0 %v209
    %233 = vmatprep.subr.mxu0 0.0
    %234 = vmatpush1.msra.mxu0 %v210
    %235 = vmatprep.subr.mxu0 0.0
    %236 = vmatpush1.msra.mxu0 %v211
    %237 = vmatprep.subr.mxu0 0.0
    %238 = vmatpush1.msra.mxu0 %v212
    %239 = vmatprep.subr.mxu0 0.0
    %240 = vmatpush1.msra.mxu0 %v213
    %241 = vmatprep.subr.mxu0 0.0
    %242 = vmatpush1.msra.mxu0 %v214
    %243 = vmatprep.subr.mxu0 0.0
    %244 = vmatpush1.msra.mxu0 %v215
    %245 = vmatprep.subr.mxu0 0.0
    %246 = vmatpush1.msra.mxu0 %v216
    %247 = vmatprep.subr.mxu0 0.0
    %248 = vmatpush1.msra.mxu0 %v217
    %249 = vmatprep.subr.mxu0 0.0
    %250 = vmatpush1.msra.mxu0 %v218
    %251 = vmatprep.subr.mxu0 0.0
    %252 = vmatpush1.msra.mxu0 %v219
    %253 = vmatprep.subr.mxu0 0.0
    %254 = vmatpush1.msra.mxu0 %v220
    %255 = vmatprep.subr.mxu0 0.0
    %256 = vmatpush1.msra.mxu0 %v221
    %257 = vmatprep.subr.mxu0 0.0
    %258 = vmatpush1.msra.mxu0 %v222
    %259 = vmatprep.subr.mxu0 0.0
    %260 = vmatpush1.msra.mxu0 %v223
    %261 = vmatprep.subr.mxu0 0.0
    %262 = vmatpush1.msra.mxu0 0.0
    %263 = vmatprep.subr.mxu0 0.0
    %264 = vmatpush1.msra.mxu0 0.0
    %265 = vmatprep.subr.mxu0 0.0
    %266 = vmatpush1.msra.mxu0 0.0
    %267 = vmatprep.subr.mxu0 0.0
    %268 = vmatpush1.msra.mxu0 0.0
    %269 = vmatprep.subr.mxu0 0.0
    %270 = vmatpush1.msra.mxu0 0.0
    %271 = vmatprep.subr.mxu0 0.0
    %272 = vmatpush1.msra.mxu0 0.0
    %273 = vmatprep.subr.mxu0 0.0
    %274 = vmatpush1.msra.mxu0 0.0
    %275 = vmatprep.subr.mxu0 0.0
    %276 = vmatpush1.msra.mxu0 0.0
    %277 = vmatprep.subr.mxu0 0.0
    %278 = vmatpush1.msra.mxu0 0.0
    %279 = vmatprep.subr.mxu0 0.0
    %280 = vmatpush1.msra.mxu0 0.0
    %281 = vmatprep.subr.mxu0 0.0
    %282 = vmatpush1.msra.mxu0 0.0
    %283 = vmatprep.subr.mxu0 0.0
    %284 = vmatpush1.msra.mxu0 0.0
    %285 = vmatprep.subr.mxu0 0.0
    %286 = vmatpush1.msra.mxu0 0.0
    %287 = vmatprep.subr.mxu0 0.0
    %288 = vmatpush1.msra.mxu0 0.0
    %289 = vmatprep.subr.mxu0 0.0
    %290 = vmatpush1.msra.mxu0 0.0
    %291 = vmatprep.subr.mxu0 0.0
    %292 = vmatpush1.msra.mxu0 0.0
    %293 = vmatprep.mubr.f32.mxu0 0.0
    %294 = vmatmul.mubr.f32.gmra.mrb[0].mxu0 %v207
    %v295 = vpop.f32.mrb[0].mxu0
    %v296 = vadd.f32 %v228, %v295
    %v297 = vpop.f32.mrb[0].mxu0
    %298 = vdwg.mxu0
    %vm299 = vcmp.lt.s32.totalorder %v171, 32
    %vm300 = vcmp.ge.s32.totalorder %v171, 32
    %vm301 = vmand %vm300, %vm172
    %v302 = vsel %vm299, %v296, 0.0
    %303 = vadd.xlane.f32.xlu0 %v302
    %v304 = vpop.xlane.xlu0 %303
    %v305 = vsel %vm301, %v296, 0.0
    %306 = vadd.xlane.f32.xlu0 %v305
    %v307 = vpop.xlane.xlu0 %306
    %v308 = vsel %vm299, %v304, %v307
    %v309 = vmul.f32 %v308, 0.03125
    %v310 = vsub.f32 %v296, %v309
    %v311 = vmul.f32 %v310, %v310
    %v312 = vsel %vm299, %v311, 0.0
    %313 = vadd.xlane.f32.xlu0 %v312
    %v314 = vpop.xlane.xlu0 %313
    %v315 = vsel %vm301, %v311, 0.0
    %316 = vadd.xlane.f32.xlu0 %v315
    %v317 = vpop.xlane.xlu0 %316
    %v318 = vsel %vm299, %v314, %v317
    %v319 = vmul.f32 %v318, 0.03125
    %v320 = vadd.f32 %v319, 1e-05
    %v321 = vrsqrt.pop %v320
    %v322 = vmul.f32 %v310, %v321
    %v323 = vlaneseq
    %v324 = vshrl.u32 %v323, 7
    %v325 = vsub.s32 1, %v324
    %v326 = vrot.slane %v224, %v325
    %v327 = vmul.f32 %v322, %v326
    %v328 = vlaneseq
    %v329 = vshrl.u32 %v328, 7
    %v330 = vsub.s32 2, %v329
    %v331 = vrot.slane %v224, %v330
    %v332 = vadd.f32 %v327, %v331
    %v333 = vmax.f32 %v332, 0.0
    %v334 = vld [vmem:[%s7] sm:$0x3]
    %v335 = vlaneseq
    %v336 = vshrl.u32 %v335, 7
    %v337 = vsub.s32 0, %v336
    %v338 = vrot.slane %v334, %v337
    %v339 = vmul.f32 %v333, %v338
    %340 = vadd.xlane.f32.xlu0 %v339
    %v341 = vpop.xlane.xlu0 %340
    %v342 = vlaneseq
    %v343 = vshrl.u32 %v342, 7
    %v344 = vsub.s32 1, %v343
    %v345 = vrot.slane %v334, %v344
    %v346 = vadd.f32 %v341, %v345
    %vm347 = vcmp.eq.s32.totalorder %v171, 64
    %349 = vset.pattern.permute.xlu0 0
    %350 = vperm.xlu0 %349, %v346
    %v351 = vpop.permute.xlu0 %350
    %v353 = vsel %vm347, %v351, %v333
    %354 = vst [vmem:[%s8] sm:$0xff] %v353
    // Predicated region
    $region38: #{input_module_forward.1} parent=1 // pred_check
      _
    $region39: #{input_module_forward.1} parent=1 // pred_check_branch
      %356 = sbr.rel (0) target = $region41
    $region40: #{input_module_forward.1} parent=1 // pred_region
      _
    $region41: #{input_module_forward.1} parent=1 // pred_fallthru
      _
    // Predicated region
    $region42: #{input_module_forward.1} parent=1 // pred_check
      _
    $region43: #{input_module_forward.1} parent=1 // pred_check_branch
      %358 = sbr.rel (0) target = $region45
    $region44: #{input_module_forward.1} parent=1 // pred_region
      _
    $region45: #{input_module_forward.1} parent=1 // pred_fallthru
      _
    %359 = vsyncpa [#allocation3], 1

</llo_original>
